<compile_context>
chip_gen: v6e
topology: v6e:2x2x1
jax: 0.10.0
libtpu: 0.0.40
codegen_flags: <defaults>
</compile_context>

<pallas_src>
import math

import jax
import jax.numpy as jnp
from jax import lax
from jax.experimental import pallas as pl
from jax.experimental.pallas import tpu as pltpu

# ---------------- model dims (small, consistent with the module) ----------
B = 2            # batch
S = 8            # sequence length
C_IN = 4         # in_channels
IN = C_IN + 1    # after concat with t (time_embed_channels=None -> Identity)
E = 32           # hidden_features (embed_dim of attention block)
LIN = E          # linear_dim of AttentionBlock == hidden_features
NUM_HEADS = 1    # num_heads (default); single-head path only
EPS = 1e-5       # torch.nn.LayerNorm default eps
BS = B * S
NEG = -1e30      # finite additive mask value (no -inf hazard)

# rows of the packed (10, E) vector table
_BIN, _BQ, _BK, _BV, _BO, _G1, _BE1, _BL, _G2, _BE2 = range(10)


# ---------------- Pallas kernel -------------------------------------------
def attention_maf_kernel(
    x_ref,        # (BS, C_IN)  pre-flattened input
    t_ref,        # (BS, 1)     pre-flattened time
    wx_ref,       # (C_IN, E)   input_layer weight, x part
    wt_ref,       # (1, E)      input_layer weight, t part
    wq_ref,       # (E, E)      in_proj weight, q part
    wk_ref,       # (E, E)      in_proj weight, k part
    wv_ref,       # (E, E)      in_proj weight, v part
    wo_ref,       # (E, E)      out_proj weight
    wl_ref,       # (E, LIN)    linear_layer weight
    vec_ref,      # (10, E)     packed biases / LN gammas / LN betas
    mask_ref,     # (BS, BS)    additive mask: 0 (attend) / -1e30 (blocked)
    out_ref,      # (BS, LIN)
):
    x2 = x_ref[...]                                        # (BS, C_IN)
    t2 = t_ref[...]                                        # (BS, 1)

    # input_layer (concat folded: cat([x,t]) @ W == x@Wx + t*wt) + ReLU
    h = (jnp.dot(x2, wx_ref[...], preferred_element_type=jnp.float32)
         + t2 * wt_ref[...] + vec_ref[_BIN:_BIN + 1, :])
    h = jnp.maximum(h, 0.0)                                # (BS, E)

    # --- MultiheadAttention (single head), flattened 2D form --------------
    q = jnp.dot(h, wq_ref[...], preferred_element_type=jnp.float32) \
        + vec_ref[_BQ:_BQ + 1, :]                          # (BS, E)
    k = jnp.dot(h, wk_ref[...], preferred_element_type=jnp.float32) \
        + vec_ref[_BK:_BK + 1, :]
    v = jnp.dot(h, wv_ref[...], preferred_element_type=jnp.float32) \
        + vec_ref[_BV:_BV + 1, :]

    scale = 1.0 / math.sqrt(E // NUM_HEADS)
    # (BS, BS) = q @ k^T via contraction on the last dims (no materialized
    # transpose); combined block-diagonal + causal mask is a single VPU add.
    scores = lax.dot_general(q, k, (((1,), (1,)), ((), ())),
                             preferred_element_type=jnp.float32) * scale
    scores = scores + mask_ref[...]

    # row-wise softmax; exact divide (approx vrcp caused the 2.4e-3 mismatch)
    m = jnp.max(scores, axis=-1, keepdims=True)
    p = jnp.exp(scores - m)
    p = p / jnp.sum(p, axis=-1, keepdims=True)

    attn = jnp.dot(p, v, preferred_element_type=jnp.float32)          # (BS, E)
    o = (jnp.dot(attn, wo_ref[...], preferred_element_type=jnp.float32)
         + vec_ref[_BO:_BO + 1, :])

    # residual + LayerNorm1 (biased variance, as in torch)
    r = h + o
    mu1 = jnp.mean(r, axis=-1, keepdims=True)
    var1 = jnp.mean((r - mu1) * (r - mu1), axis=-1, keepdims=True)
    rn = ((r - mu1) * lax.rsqrt(var1 + EPS) * vec_ref[_G1:_G1 + 1, :]
          + vec_ref[_BE1:_BE1 + 1, :])

    # Linear -> ReLU -> LayerNorm2
    z = (jnp.dot(rn, wl_ref[...], preferred_element_type=jnp.float32)
         + vec_ref[_BL:_BL + 1, :])
    z = jnp.maximum(z, 0.0)
    mu2 = jnp.mean(z, axis=-1, keepdims=True)
    var2 = jnp.mean((z - mu2) * (z - mu2), axis=-1, keepdims=True)
    out = ((z - mu2) * lax.rsqrt(var2 + EPS) * vec_ref[_G2:_G2 + 1, :]
           + vec_ref[_BE2:_BE2 + 1, :])

    # single contiguous 2D store; wrapper reshapes to (B, S, LIN) for free
    out_ref[...] = out.astype(out_ref.dtype)


# ---------------- load-time parameter packing (runs ONCE) ------------------
def pack_params(p):
    """Repack torch-style parameters into kernel-friendly arrays. Do this once
    at model-load time; the per-call forward only passes the packed arrays."""
    vec = jnp.concatenate(
        [p["bin"], p["bq"], p["bk"], p["bv"], p["bo"],
         p["g1"], p["be1"], p["bl"], p["g2"], p["be2"]], axis=0)      # (10, E)

    # Combined additive mask for the flattened (BS, BS) attention:
    # allow only same-batch AND non-future key positions (look_ahead_mask).
    row = jnp.arange(BS)[:, None]
    col = jnp.arange(BS)[None, :]
    allowed = (row // S == col // S) & (col <= row)
    mask = jnp.where(allowed, 0.0, NEG).astype(jnp.float32)           # (BS, BS)

    return {
        "wx": p["win"][:C_IN, :],       # (C_IN, E)
        "wt": p["win"][C_IN:, :],       # (1, E)
        "wq": p["wq"], "wk": p["wk"], "wv": p["wv"],
        "wo": p["wo"], "wl": p["wl"],
        "vec": vec, "mask": mask,
    }


# ---------------- per-call wrapper -----------------------------------------
@jax.jit
def attention_maf_forward(x, t, packed):
    """x: (B, S, C_IN), t: (B, S, 1), packed = pack_params(p) -> (B, S, LIN)."""
    # free XLA metadata reshapes; no reshapes inside the kernel
    x2 = x.reshape(BS, C_IN)
    t2 = t.reshape(BS, 1)

    args = (x2, t2, packed["wx"], packed["wt"],
            packed["wq"], packed["wk"], packed["wv"],
            packed["wo"], packed["wl"], packed["vec"], packed["mask"])

    out2 = pl.pallas_call(
        attention_maf_kernel,
        out_shape=jax.ShapeDtypeStruct((BS, LIN), jnp.float32),
        in_specs=[pl.BlockSpec(memory_space=pltpu.MemorySpace.VMEM)
                  for _ in args],
        out_specs=pl.BlockSpec(memory_space=pltpu.MemorySpace.VMEM),
    )(*args)
    return out2.reshape(B, S, LIN)


# ---------------- pure-JAX reference (for correctness check) ---------------
def reference_forward(x, t, p):
    xt = jnp.concatenate([x, t], axis=-1)
    h = jax.nn.relu(xt @ p["win"] + p["bin"])
    q = h @ p["wq"] + p["bq"]
    k = h @ p["wk"] + p["bk"]
    v = h @ p["wv"] + p["bv"]
    scores = jnp.einsum("bqd,bkd->bqk", q, k) / math.sqrt(E // NUM_HEADS)
    mask = jnp.triu(jnp.full((S, S), -jnp.inf), k=1)
    scores = scores + mask[None]
    pattn = jax.nn.softmax(scores, axis=-1)
    o = jnp.einsum("bqk,bkd->bqd", pattn, v) @ p["wo"] + p["bo"]
    r = h + o
    mu = r.mean(-1, keepdims=True)
    var = ((r - mu) ** 2).mean(-1, keepdims=True)
    rn = (r - mu) / jnp.sqrt(var + EPS) * p["g1"] + p["be1"]
    z = jax.nn.relu(rn @ p["wl"] + p["bl"])
    mu2 = z.mean(-1, keepdims=True)
    var2 = ((z - mu2) ** 2).mean(-1, keepdims=True)
    return (z - mu2) / jnp.sqrt(var2 + EPS) * p["g2"] + p["be2"]


# ---------------- deterministic parameter init ------------------------------
def init_params(key):
    keys = jax.random.split(key, 12)

    def unif(k, shape, fan_in):
        bound = 1.0 / math.sqrt(fan_in)
        return jax.random.uniform(k, shape, jnp.float32, -bound, bound)

    return {
        "win": unif(keys[0], (IN, E), IN),
        "bin": unif(keys[1], (1, E), IN),
        "wq": unif(keys[2], (E, E), E),
        "bq": unif(keys[3], (1, E), E),
        "wk": unif(keys[4], (E, E), E),
        "bk": unif(keys[5], (1, E), E),
        "wv": unif(keys[6], (E, E), E),
        "bv": unif(keys[7], (1, E), E),
        "wo": unif(keys[8], (E, E), E),
        "bo": unif(keys[9], (1, E), E),
        "g1": jnp.ones((1, E), jnp.float32),    # torch LayerNorm default init
        "be1": jnp.zeros((1, E), jnp.float32),
        "wl": unif(keys[10], (E, LIN), E),
        "bl": unif(keys[11], (1, LIN), E),
        "g2": jnp.ones((1, LIN), jnp.float32),
        "be2": jnp.zeros((1, LIN), jnp.float32),
    }


# TODO(synk): maf_blocks (nflows MAF) is not used in forward(); log_prob/sample
# paths that call it are out of scope for this kernel.

if __name__ == "__main__":
    key = jax.random.PRNGKey(0)
    kx, kt, kp = jax.random.split(key, 3)
    x = jax.random.normal(kx, (B, S, C_IN), jnp.float32)
    t = jax.random.normal(kt, (B, S, 1), jnp.float32)
    params = init_params(kp)

    # done once at load time (not per forward call)
    packed = jax.tree_util.tree_map(jax.block_until_ready, pack_params(params))

    out = attention_maf_forward(x, t, packed)
    out = jax.block_until_ready(out)

    ref = reference_forward(x, t, params)
    assert out.shape == (B, S, LIN)
    assert jnp.allclose(out, ref, rtol=1e-3, atol=1e-3), (
        f"max abs err = {jnp.max(jnp.abs(out - ref))}")

    print("KERNEL_OK")
</pallas_src>

<mosaic_0001>
module attributes {stable_mosaic.version = 11 : i64} {
  func.func @attention_maf_kernel(%arg0: memref<16x4xf32, #tpu.memory_space<vmem>>, %arg1: memref<16x1xf32, #tpu.memory_space<vmem>>, %arg2: memref<4x32xf32, #tpu.memory_space<vmem>>, %arg3: memref<1x32xf32, #tpu.memory_space<vmem>>, %arg4: memref<32x32xf32, #tpu.memory_space<vmem>>, %arg5: memref<32x32xf32, #tpu.memory_space<vmem>>, %arg6: memref<32x32xf32, #tpu.memory_space<vmem>>, %arg7: memref<32x32xf32, #tpu.memory_space<vmem>>, %arg8: memref<32x32xf32, #tpu.memory_space<vmem>>, %arg9: memref<10x32xf32, #tpu.memory_space<vmem>>, %arg10: memref<16x16xf32, #tpu.memory_space<vmem>>, %arg11: memref<16x32xf32, #tpu.memory_space<vmem>>) attributes {dimension_semantics = [], scalar_prefetch = 0 : i64, scratch_operands = 0 : i64, tpu.core_type = #tpu.core_type<tc>} {
    %c0 = arith.constant 0 : index
    %c0_0 = arith.constant 0 : index
    %0 = vector.load %arg0[%c0, %c0_0] : memref<16x4xf32, #tpu.memory_space<vmem>>, vector<16x4xf32>
    %c0_1 = arith.constant 0 : index
    %c0_2 = arith.constant 0 : index
    %1 = vector.load %arg1[%c0_1, %c0_2] : memref<16x1xf32, #tpu.memory_space<vmem>>, vector<16x1xf32>
    %c0_3 = arith.constant 0 : index
    %c0_4 = arith.constant 0 : index
    %2 = vector.load %arg2[%c0_3, %c0_4] : memref<4x32xf32, #tpu.memory_space<vmem>>, vector<4x32xf32>
    %cst = arith.constant dense<0.000000e+00> : vector<16x32xf32>
    %3 = tpu.matmul %0, %2, %cst {dimension_numbers = #tpu.dot_dimension_numbers<[1], [0], [0], [1], [0, 0, 1, 1], [], []>} : vector<16x4xf32>, vector<4x32xf32>, vector<16x32xf32> -> vector<16x32xf32>
    %c0_5 = arith.constant 0 : index
    %c0_6 = arith.constant 0 : index
    %4 = vector.load %arg3[%c0_5, %c0_6] : memref<1x32xf32, #tpu.memory_space<vmem>>, vector<1x32xf32>
    %5 = vector.broadcast %1 : vector<16x1xf32> to vector<16x32xf32>
    %6 = vector.broadcast %4 : vector<1x32xf32> to vector<16x32xf32>
    %7 = arith.mulf %5, %6 : vector<16x32xf32>
    %8 = arith.addf %3, %7 : vector<16x32xf32>
    %c0_7 = arith.constant 0 : index
    %c0_8 = arith.constant 0 : index
    %9 = vector.load %arg9[%c0_7, %c0_8] : memref<10x32xf32, #tpu.memory_space<vmem>>, vector<1x32xf32>
    %10 = vector.broadcast %9 : vector<1x32xf32> to vector<16x32xf32>
    %11 = arith.addf %8, %10 : vector<16x32xf32>
    %cst_9 = arith.constant 0.000000e+00 : f32
    %12 = vector.broadcast %cst_9 : f32 to vector<16x32xf32>
    %13 = arith.maximumf %11, %12 : vector<16x32xf32>
    %c0_10 = arith.constant 0 : index
    %c0_11 = arith.constant 0 : index
    %14 = vector.load %arg4[%c0_10, %c0_11] : memref<32x32xf32, #tpu.memory_space<vmem>>, vector<32x32xf32>
    %cst_12 = arith.constant dense<0.000000e+00> : vector<16x32xf32>
    %15 = tpu.matmul %13, %14, %cst_12 {dimension_numbers = #tpu.dot_dimension_numbers<[1], [0], [0], [1], [0, 0, 1, 1], [], []>} : vector<16x32xf32>, vector<32x32xf32>, vector<16x32xf32> -> vector<16x32xf32>
    %c1 = arith.constant 1 : index
    %c0_13 = arith.constant 0 : index
    %16 = vector.load %arg9[%c1, %c0_13] : memref<10x32xf32, #tpu.memory_space<vmem>>, vector<1x32xf32>
    %17 = vector.broadcast %16 : vector<1x32xf32> to vector<16x32xf32>
    %18 = arith.addf %15, %17 : vector<16x32xf32>
    %c0_14 = arith.constant 0 : index
    %c0_15 = arith.constant 0 : index
    %19 = vector.load %arg5[%c0_14, %c0_15] : memref<32x32xf32, #tpu.memory_space<vmem>>, vector<32x32xf32>
    %cst_16 = arith.constant dense<0.000000e+00> : vector<16x32xf32>
    %20 = tpu.matmul %13, %19, %cst_16 {dimension_numbers = #tpu.dot_dimension_numbers<[1], [0], [0], [1], [0, 0, 1, 1], [], []>} : vector<16x32xf32>, vector<32x32xf32>, vector<16x32xf32> -> vector<16x32xf32>
    %c2 = arith.constant 2 : index
    %c0_17 = arith.constant 0 : index
    %21 = vector.load %arg9[%c2, %c0_17] : memref<10x32xf32, #tpu.memory_space<vmem>>, vector<1x32xf32>
    %22 = vector.broadcast %21 : vector<1x32xf32> to vector<16x32xf32>
    %23 = arith.addf %20, %22 : vector<16x32xf32>
    %c0_18 = arith.constant 0 : index
    %c0_19 = arith.constant 0 : index
    %24 = vector.load %arg6[%c0_18, %c0_19] : memref<32x32xf32, #tpu.memory_space<vmem>>, vector<32x32xf32>
    %cst_20 = arith.constant dense<0.000000e+00> : vector<16x32xf32>
    %25 = tpu.matmul %13, %24, %cst_20 {dimension_numbers = #tpu.dot_dimension_numbers<[1], [0], [0], [1], [0, 0, 1, 1], [], []>} : vector<16x32xf32>, vector<32x32xf32>, vector<16x32xf32> -> vector<16x32xf32>
    %c3 = arith.constant 3 : index
    %c0_21 = arith.constant 0 : index
    %26 = vector.load %arg9[%c3, %c0_21] : memref<10x32xf32, #tpu.memory_space<vmem>>, vector<1x32xf32>
    %27 = vector.broadcast %26 : vector<1x32xf32> to vector<16x32xf32>
    %28 = arith.addf %25, %27 : vector<16x32xf32>
    %cst_22 = arith.constant dense<0.000000e+00> : vector<16x16xf32>
    %29 = tpu.matmul %18, %23, %cst_22 {dimension_numbers = #tpu.dot_dimension_numbers<[1], [1], [0], [0], [0, 0, 1, 0], [], []>} : vector<16x32xf32>, vector<16x32xf32>, vector<16x16xf32> -> vector<16x16xf32>
    %cst_23 = arith.constant 0.176776692 : f32
    %30 = vector.broadcast %cst_23 : f32 to vector<16x16xf32>
    %31 = arith.mulf %29, %30 : vector<16x16xf32>
    %c0_24 = arith.constant 0 : index
    %c0_25 = arith.constant 0 : index
    %32 = vector.load %arg10[%c0_24, %c0_25] : memref<16x16xf32, #tpu.memory_space<vmem>>, vector<16x16xf32>
    %33 = arith.addf %31, %32 : vector<16x16xf32>
    %cst_26 = arith.constant dense<0xFF800000> : vector<16xf32>
    %34 = vector.multi_reduction <maximumf>, %33, %cst_26 [1] : vector<16x16xf32> to vector<16xf32>
    %35 = vector.shape_cast %34 : vector<16xf32> to vector<16x1xf32>
    %36 = vector.broadcast %35 : vector<16x1xf32> to vector<16x16xf32>
    %37 = arith.subf %33, %36 : vector<16x16xf32>
    %38 = math.exp %37 : vector<16x16xf32>
    %cst_27 = arith.constant dense<0.000000e+00> : vector<16xf32>
    %39 = vector.multi_reduction <add>, %38, %cst_27 [1] : vector<16x16xf32> to vector<16xf32>
    %40 = vector.shape_cast %39 : vector<16xf32> to vector<16x1xf32>
    %41 = vector.broadcast %40 : vector<16x1xf32> to vector<16x16xf32>
    %42 = arith.divf %38, %41 : vector<16x16xf32>
    %cst_28 = arith.constant dense<0.000000e+00> : vector<16x32xf32>
    %43 = tpu.matmul %42, %28, %cst_28 {dimension_numbers = #tpu.dot_dimension_numbers<[1], [0], [0], [1], [0, 0, 1, 1], [], []>} : vector<16x16xf32>, vector<16x32xf32>, vector<16x32xf32> -> vector<16x32xf32>
    %c0_29 = arith.constant 0 : index
    %c0_30 = arith.constant 0 : index
    %44 = vector.load %arg7[%c0_29, %c0_30] : memref<32x32xf32, #tpu.memory_space<vmem>>, vector<32x32xf32>
    %cst_31 = arith.constant dense<0.000000e+00> : vector<16x32xf32>
    %45 = tpu.matmul %43, %44, %cst_31 {dimension_numbers = #tpu.dot_dimension_numbers<[1], [0], [0], [1], [0, 0, 1, 1], [], []>} : vector<16x32xf32>, vector<32x32xf32>, vector<16x32xf32> -> vector<16x32xf32>
    %c4 = arith.constant 4 : index
    %c0_32 = arith.constant 0 : index
    %46 = vector.load %arg9[%c4, %c0_32] : memref<10x32xf32, #tpu.memory_space<vmem>>, vector<1x32xf32>
    %47 = vector.broadcast %46 : vector<1x32xf32> to vector<16x32xf32>
    %48 = arith.addf %45, %47 : vector<16x32xf32>
    %49 = arith.addf %13, %48 : vector<16x32xf32>
    %cst_33 = arith.constant dense<0.000000e+00> : vector<16xf32>
    %50 = vector.multi_reduction <add>, %49, %cst_33 [1] : vector<16x32xf32> to vector<16xf32>
    %51 = vector.shape_cast %50 : vector<16xf32> to vector<16x1xf32>
    %cst_34 = arith.constant 3.200000e+01 : f32
    %52 = vector.broadcast %cst_34 : f32 to vector<16x1xf32>
    %53 = arith.divf %51, %52 : vector<16x1xf32>
    %54 = vector.broadcast %53 : vector<16x1xf32> to vector<16x32xf32>
    %55 = arith.subf %49, %54 : vector<16x32xf32>
    %56 = vector.broadcast %53 : vector<16x1xf32> to vector<16x32xf32>
    %57 = arith.subf %49, %56 : vector<16x32xf32>
    %58 = arith.mulf %55, %57 : vector<16x32xf32>
    %cst_35 = arith.constant dense<0.000000e+00> : vector<16xf32>
    %59 = vector.multi_reduction <add>, %58, %cst_35 [1] : vector<16x32xf32> to vector<16xf32>
    %60 = vector.shape_cast %59 : vector<16xf32> to vector<16x1xf32>
    %cst_36 = arith.constant 3.200000e+01 : f32
    %61 = vector.broadcast %cst_36 : f32 to vector<16x1xf32>
    %62 = arith.divf %60, %61 : vector<16x1xf32>
    %63 = vector.broadcast %53 : vector<16x1xf32> to vector<16x32xf32>
    %64 = arith.subf %49, %63 : vector<16x32xf32>
    %cst_37 = arith.constant 9.99999974E-6 : f32
    %65 = vector.broadcast %cst_37 : f32 to vector<16x1xf32>
    %66 = arith.addf %62, %65 : vector<16x1xf32>
    %67 = math.rsqrt %66 : vector<16x1xf32>
    %68 = vector.broadcast %67 : vector<16x1xf32> to vector<16x32xf32>
    %69 = arith.mulf %64, %68 : vector<16x32xf32>
    %c5 = arith.constant 5 : index
    %c0_38 = arith.constant 0 : index
    %70 = vector.load %arg9[%c5, %c0_38] : memref<10x32xf32, #tpu.memory_space<vmem>>, vector<1x32xf32>
    %71 = vector.broadcast %70 : vector<1x32xf32> to vector<16x32xf32>
    %72 = arith.mulf %69, %71 : vector<16x32xf32>
    %c6 = arith.constant 6 : index
    %c0_39 = arith.constant 0 : index
    %73 = vector.load %arg9[%c6, %c0_39] : memref<10x32xf32, #tpu.memory_space<vmem>>, vector<1x32xf32>
    %74 = vector.broadcast %73 : vector<1x32xf32> to vector<16x32xf32>
    %75 = arith.addf %72, %74 : vector<16x32xf32>
    %c0_40 = arith.constant 0 : index
    %c0_41 = arith.constant 0 : index
    %76 = vector.load %arg8[%c0_40, %c0_41] : memref<32x32xf32, #tpu.memory_space<vmem>>, vector<32x32xf32>
    %cst_42 = arith.constant dense<0.000000e+00> : vector<16x32xf32>
    %77 = tpu.matmul %75, %76, %cst_42 {dimension_numbers = #tpu.dot_dimension_numbers<[1], [0], [0], [1], [0, 0, 1, 1], [], []>} : vector<16x32xf32>, vector<32x32xf32>, vector<16x32xf32> -> vector<16x32xf32>
    %c7 = arith.constant 7 : index
    %c0_43 = arith.constant 0 : index
    %78 = vector.load %arg9[%c7, %c0_43] : memref<10x32xf32, #tpu.memory_space<vmem>>, vector<1x32xf32>
    %79 = vector.broadcast %78 : vector<1x32xf32> to vector<16x32xf32>
    %80 = arith.addf %77, %79 : vector<16x32xf32>
    %cst_44 = arith.constant 0.000000e+00 : f32
    %81 = vector.broadcast %cst_44 : f32 to vector<16x32xf32>
    %82 = arith.maximumf %80, %81 : vector<16x32xf32>
    %cst_45 = arith.constant dense<0.000000e+00> : vector<16xf32>
    %83 = vector.multi_reduction <add>, %82, %cst_45 [1] : vector<16x32xf32> to vector<16xf32>
    %84 = vector.shape_cast %83 : vector<16xf32> to vector<16x1xf32>
    %cst_46 = arith.constant 3.200000e+01 : f32
    %85 = vector.broadcast %cst_46 : f32 to vector<16x1xf32>
    %86 = arith.divf %84, %85 : vector<16x1xf32>
    %87 = vector.broadcast %86 : vector<16x1xf32> to vector<16x32xf32>
    %88 = arith.subf %82, %87 : vector<16x32xf32>
    %89 = vector.broadcast %86 : vector<16x1xf32> to vector<16x32xf32>
    %90 = arith.subf %82, %89 : vector<16x32xf32>
    %91 = arith.mulf %88, %90 : vector<16x32xf32>
    %cst_47 = arith.constant dense<0.000000e+00> : vector<16xf32>
    %92 = vector.multi_reduction <add>, %91, %cst_47 [1] : vector<16x32xf32> to vector<16xf32>
    %93 = vector.shape_cast %92 : vector<16xf32> to vector<16x1xf32>
    %cst_48 = arith.constant 3.200000e+01 : f32
    %94 = vector.broadcast %cst_48 : f32 to vector<16x1xf32>
    %95 = arith.divf %93, %94 : vector<16x1xf32>
    %96 = vector.broadcast %86 : vector<16x1xf32> to vector<16x32xf32>
    %97 = arith.subf %82, %96 : vector<16x32xf32>
    %cst_49 = arith.constant 9.99999974E-6 : f32
    %98 = vector.broadcast %cst_49 : f32 to vector<16x1xf32>
    %99 = arith.addf %95, %98 : vector<16x1xf32>
    %100 = math.rsqrt %99 : vector<16x1xf32>
    %101 = vector.broadcast %100 : vector<16x1xf32> to vector<16x32xf32>
    %102 = arith.mulf %97, %101 : vector<16x32xf32>
    %c8 = arith.constant 8 : index
    %c0_50 = arith.constant 0 : index
    %103 = vector.load %arg9[%c8, %c0_50] : memref<10x32xf32, #tpu.memory_space<vmem>>, vector<1x32xf32>
    %104 = vector.broadcast %103 : vector<1x32xf32> to vector<16x32xf32>
    %105 = arith.mulf %102, %104 : vector<16x32xf32>
    %c9 = arith.constant 9 : index
    %c0_51 = arith.constant 0 : index
    %106 = vector.load %arg9[%c9, %c0_51] : memref<10x32xf32, #tpu.memory_space<vmem>>, vector<1x32xf32>
    %107 = vector.broadcast %106 : vector<1x32xf32> to vector<16x32xf32>
    %108 = arith.addf %105, %107 : vector<16x32xf32>
    %c0_52 = arith.constant 0 : index
    %c0_53 = arith.constant 0 : index
    %109 = vector.load %arg11[%c0_52, %c0_53] : memref<16x32xf32, #tpu.memory_space<vmem>>, vector<16x32xf32>
    tpu.vector_store %arg11[%c0_52, %c0_53], %108 {strides = array<i32>} : memref<16x32xf32, #tpu.memory_space<vmem>>, vector<16x32xf32>,
    return
  }
}

</mosaic_0001>

<llo_original>
// kernel: attention_maf_forward.1
$region0: #{attention_maf_forward.1}
  #allocation0 [shape = 'u32[]', space=smem, size = 0x4, offset = 0x4, fixed_abs, tag = 'smem constant byte address 0x4 - core index']
  #allocation1 [shape = 'u32[144,128]{1,0:T(1,128)}', space=vmem, size = 0x12000, scoped, tag = 'internal scratch']
  %s0 = inlined_call_operand.vmem [shape: f32[16,4], index: 0, kind: input, shape index: {}]
  %s1 = inlined_call_operand.vmem [shape: f32[16,1], index: 1, kind: input, shape index: {}]
  %s2 = inlined_call_operand.vmem [shape: f32[4,32], index: 2, kind: input, shape index: {}]
  %s3 = inlined_call_operand.vmem [shape: f32[1,32], index: 3, kind: input, shape index: {}]
  %s4 = inlined_call_operand.vmem [shape: f32[32,32], index: 4, kind: input, shape index: {}]
  %s5 = inlined_call_operand.hbm [shape: f32[32,32], index: 5, kind: input, shape index: {}]
  %s6 = inlined_call_operand.vmem [shape: f32[32,32], index: 6, kind: input, shape index: {}]
  %s7 = inlined_call_operand.hbm [shape: f32[32,32], index: 7, kind: input, shape index: {}]
  %s8 = inlined_call_operand.hbm [shape: f32[32,32], index: 8, kind: input, shape index: {}]
  %s9 = inlined_call_operand.hbm [shape: f32[10,32], index: 9, kind: input, shape index: {}]
  %s10 = inlined_call_operand.hbm [shape: f32[16,16], index: 10, kind: input, shape index: {}]
  %s11 = inlined_call_operand.hbm [shape: f32[16,32], index: 11, kind: output, shape index: {}]
  %s12 = sld [smem:[#allocation0]]
  $region74: #{attention_maf_forward.1} parent=0
    _
  %s14 = ssub.s32 1, %s12
  %s15 = scalar_select 0, %s14, %s12
  $region1: #{attention_maf_forward.1} parent=0
    #allocation2 [shape = 'u8[16384]{0}', space=vmem, size = 0x4000, scoped, tag = 'input window, operand 5, single buffered']
    #allocation3 [shape = 's32[1]{0}', space=sflag, size = 0x4, scoped, tag = 'scoped memory for attention_maf_forward.1']
    #allocation4 [shape = 's32[1]{0}', space=sflag, size = 0x4, scoped, tag = 'scoped memory for attention_maf_forward.1']
    #allocation5 [shape = 'u8[16384]{0}', space=vmem, size = 0x4000, scoped, tag = 'input window, operand 7, single buffered']
    #allocation6 [shape = 's32[1]{0}', space=sflag, size = 0x4, scoped, tag = 'scoped memory for attention_maf_forward.1']
    #allocation7 [shape = 'u8[16384]{0}', space=vmem, size = 0x4000, scoped, tag = 'input window, operand 8, single buffered']
    #allocation8 [shape = 'u8[8192]{0}', space=vmem, size = 0x2000, scoped, tag = 'input window, operand 9, single buffered']
    #allocation9 [shape = 's32[1]{0}', space=sflag, size = 0x4, scoped, tag = 'scoped memory for attention_maf_forward.1']
    #allocation10 [shape = 'u8[8192]{0}', space=vmem, size = 0x2000, scoped, tag = 'input window, operand 10, single buffered']
    #allocation11 [shape = 'u8[8192]{0}', space=vmem, size = 0x2000, scoped, tag = 'output window, operand 0, single buffered']
    %16 = vsyncpa [#allocation3], 0
    %17 = vsyncpa [#allocation6], 0
    %18 = vsyncpa [#allocation9], 0
    %19 = vsyncpa [#allocation4], 0
    // Predicated region
    $region2: #{attention_maf_forward.1} parent=1 // pred_check
      _
    $region3: #{attention_maf_forward.1} parent=1 // pred_check_branch
      %21 = sbr.rel (0) target = $region5
    $region4: #{attention_maf_forward.1} parent=1 // pred_region
      _
    $region5: #{attention_maf_forward.1} parent=1 // pred_fallthru
      _
    // Predicated region
    $region6: #{attention_maf_forward.1} parent=1 // pred_check
      _
    $region7: #{attention_maf_forward.1} parent=1 // pred_check_branch
      %23 = sbr.rel (0) target = $region9
    $region8: #{attention_maf_forward.1} parent=1 // pred_region
      _
    $region9: #{attention_maf_forward.1} parent=1 // pred_fallthru
      _
    // Predicated region
    $region10: #{attention_maf_forward.1} parent=1 // pred_check
      _
    $region11: #{attention_maf_forward.1} parent=1 // pred_check_branch
      %25 = sbr.rel (0) target = $region13
    $region12: #{attention_maf_forward.1} parent=1 // pred_region
      _
    $region13: #{attention_maf_forward.1} parent=1 // pred_fallthru
      _
    // Predicated region
    $region14: #{attention_maf_forward.1} parent=1 // pred_check
      _
    $region15: #{attention_maf_forward.1} parent=1 // pred_check_branch
      %27 = sbr.rel (0) target = $region17
    $region16: #{attention_maf_forward.1} parent=1 // pred_region
      _
    $region17: #{attention_maf_forward.1} parent=1 // pred_fallthru
      _
    // Predicated region
    $region18: #{attention_maf_forward.1} parent=1 // pred_check
      _
    $region19: #{attention_maf_forward.1} parent=1 // pred_check_branch
      %29 = sbr.rel (0) target = $region21
    $region20: #{attention_maf_forward.1} parent=1 // pred_region
      _
    $region21: #{attention_maf_forward.1} parent=1 // pred_fallthru
      _
    // Predicated region
    $region22: #{attention_maf_forward.1} parent=1 // pred_check
      _
    $region23: #{attention_maf_forward.1} parent=1 // pred_check_branch
      %31 = sbr.rel (0) target = $region25
    $region24: #{attention_maf_forward.1} parent=1 // pred_region
      %s33 = ssub.s32 512, 512
      %34 = vsyncadd [#allocation3], %s33
      %s35 = sshll.u32 [#allocation2], 4
      %s36 = int_to_ptr.vmem [resolvable:$true] %s35
      %41 = dma.hbm_to_vmem [thread:$0]  %s5, 512, %s36, [#allocation3], 128, 128, 8
    $region25: #{attention_maf_forward.1} parent=1 // pred_fallthru
      _
    // Predicated region
    $region26: #{attention_maf_forward.1} parent=1 // pred_check
      _
    $region27: #{attention_maf_forward.1} parent=1 // pred_check_branch
      %43 = sbr.rel (0) target = $region29
    $region28: #{attention_maf_forward.1} parent=1 // pred_region
      _
    $region29: #{attention_maf_forward.1} parent=1 // pred_fallthru
      _
    // Predicated region
    $region30: #{attention_maf_forward.1} parent=1 // pred_check
      _
    $region31: #{attention_maf_forward.1} parent=1 // pred_check_branch
      %45 = sbr.rel (0) target = $region33
    $region32: #{attention_maf_forward.1} parent=1 // pred_region
      %s47 = ssub.s32 512, 512
      %48 = vsyncadd [#allocation6], %s47
      %s49 = sshll.u32 [#allocation5], 4
      %s50 = int_to_ptr.vmem [resolvable:$true] %s49
      %55 = dma.hbm_to_vmem [thread:$0]  %s7, 512, %s50, [#allocation6], 128, 128, 8
    $region33: #{attention_maf_forward.1} parent=1 // pred_fallthru
      _
    // Predicated region
    $region34: #{attention_maf_forward.1} parent=1 // pred_check
      _
    $region35: #{attention_maf_forward.1} parent=1 // pred_check_branch
      %57 = sbr.rel (0) target = $region37
    $region36: #{attention_maf_forward.1} parent=1 // pred_region
      %s59 = ssub.s32 512, 512
      %60 = vsyncadd [#allocation6], %s59
      %s61 = sshll.u32 [#allocation7], 4
      %s62 = int_to_ptr.vmem [resolvable:$true] %s61
      %67 = dma.hbm_to_vmem [thread:$0]  %s8, 512, %s62, [#allocation6], 128, 128, 8
    $region37: #{attention_maf_forward.1} parent=1 // pred_fallthru
      _
    // Predicated region
    $region38: #{attention_maf_forward.1} parent=1 // pred_check
      _
    $region39: #{attention_maf_forward.1} parent=1 // pred_check_branch
      %69 = sbr.rel (0) target = $region41
    $region40: #{attention_maf_forward.1} parent=1 // pred_region
      %s71 = ssub.s32 256, 256
      %72 = vsyncadd [#allocation9], %s71
      %s73 = sshll.u32 [#allocation8], 4
      %s74 = int_to_ptr.vmem [resolvable:$true] %s73
      %79 = dma.hbm_to_vmem [thread:$0]  %s9, 256, %s74, [#allocation9], 128, 128, 8
    $region41: #{attention_maf_forward.1} parent=1 // pred_fallthru
      _
    // Predicated region
    $region42: #{attention_maf_forward.1} parent=1 // pred_check
      _
    $region43: #{attention_maf_forward.1} parent=1 // pred_check_branch
      %81 = sbr.rel (0) target = $region45
    $region44: #{attention_maf_forward.1} parent=1 // pred_region
      %s83 = ssub.s32 256, 256
      %84 = vsyncadd [#allocation9], %s83
      %s85 = sshll.u32 [#allocation10], 4
      %s86 = int_to_ptr.vmem [resolvable:$true] %s85
      %91 = dma.hbm_to_vmem [thread:$0]  %s10, 256, %s86, [#allocation9], 128, 128, 8
    $region45: #{attention_maf_forward.1} parent=1 // pred_fallthru
      _
    // Predicated region
    $region46: #{attention_maf_forward.1} parent=1 // pred_check
      _
    $region47: #{attention_maf_forward.1} parent=1 // pred_check_branch
      %93 = sbr.rel (0) target = $region49
    $region48: #{attention_maf_forward.1} parent=1 // pred_region
      %94 = dma.done [#allocation3], 512
    $region49: #{attention_maf_forward.1} parent=1 // pred_fallthru
      _
    // Predicated region
    $region50: #{attention_maf_forward.1} parent=1 // pred_check
      _
    $region51: #{attention_maf_forward.1} parent=1 // pred_check_branch
      %96 = sbr.rel (0) target = $region53
    $region52: #{attention_maf_forward.1} parent=1 // pred_region
      %97 = dma.done [#allocation6], 512
    $region53: #{attention_maf_forward.1} parent=1 // pred_fallthru
      _
    // Predicated region
    $region54: #{attention_maf_forward.1} parent=1 // pred_check
      _
    $region55: #{attention_maf_forward.1} parent=1 // pred_check_branch
      %99 = sbr.rel (0) target = $region57
    $region56: #{attention_maf_forward.1} parent=1 // pred_region
      %100 = dma.done [#allocation6], 512
    $region57: #{attention_maf_forward.1} parent=1 // pred_fallthru
      _
    // Predicated region
    $region58: #{attention_maf_forward.1} parent=1 // pred_check
      _
    $region59: #{attention_maf_forward.1} parent=1 // pred_check_branch
      %102 = sbr.rel (0) target = $region61
    $region60: #{attention_maf_forward.1} parent=1 // pred_region
      %103 = dma.done [#allocation9], 256
    $region61: #{attention_maf_forward.1} parent=1 // pred_fallthru
      _
    // Predicated region
    $region62: #{attention_maf_forward.1} parent=1 // pred_check
      _
    $region63: #{attention_maf_forward.1} parent=1 // pred_check_branch
      %105 = sbr.rel (0) target = $region65
    $region64: #{attention_maf_forward.1} parent=1 // pred_region
      %106 = dma.done [#allocation9], 256
    $region65: #{attention_maf_forward.1} parent=1 // pred_fallthru
      _
    %v107 = vld [vmem:[%s0] sm:$0xff]
    %v108 = vld [vmem:[%s0 + $0x8] sm:$0xff]
    %v109 = vld [vmem:[%s1] sm:$0xff]
    %v110 = vld [vmem:[%s1 + $0x8] sm:$0xff]
    %v111 = vld [vmem:[%s2] sm:$0xf]
    %v112 = vld [vmem:[%s3] sm:$0x1]
    %114 = vset.pattern.permute.xlu0 0
    %115 = vperm.xlu0 %114, %v109
    %v116 = vpop.permute.xlu0 %115
    %119 = vset.pattern.permute.xlu0 0
    %120 = vperm.xlu0 %119, %v110
    %v121 = vpop.permute.xlu0 %120
    %v124 = vlaneseq
    %v125 = vshrl.u32 %v124, 7
    %v126 = vsub.s32 0, %v125
    %v127 = vrot.slane %v112, %v126
    %v129 = vmul.f32 %v116, %v127
    %v130 = vmul.f32 %v121, %v127
    %vm131 = vcmask 31744
    %v133 = vsel %vm131, %v107, 0
    %v136 = vsel %vm131, %v108, 0
    %vm138 = vcmask 1043456
    %v140 = vsel %vm138, %v111, 0
    %142 = vmatprep.subr.mxu0 0.0
    %143 = vmatpush1.msra.mxu0 0.0
    %144 = vmatprep.subr.mxu0 0.0
    %145 = vmatpush1.msra.mxu0 0.0
    %146 = vmatprep.subr.mxu0 0.0
    %147 = vmatpush1.msra.mxu0 0.0
    %148 = vmatprep.subr.mxu0 0.0
    %149 = vmatpush1.msra.mxu0 0.0
    %150 = vmatprep.subr.mxu0 0.0
    %151 = vmatpush1.msra.mxu0 0.0
    %152 = vmatprep.subr.mxu0 0.0
    %153 = vmatpush1.msra.mxu0 0.0
    %154 = vmatprep.subr.mxu0 0.0
    %155 = vmatpush1.msra.mxu0 0.0
    %156 = vmatprep.subr.mxu0 0.0
    %157 = vmatpush1.msra.mxu0 0.0
    %158 = vmatprep.subr.mxu0 0.0
    %159 = vmatpush1.msra.mxu0 0.0
    %160 = vmatprep.subr.mxu0 0.0
    %161 = vmatpush1.msra.mxu0 0.0
    %162 = vmatprep.subr.mxu0 0.0
    %163 = vmatpush1.msra.mxu0 0.0
    %164 = vmatprep.subr.mxu0 0.0
    %165 = vmatpush1.msra.mxu0 0.0
    %166 = vmatprep.subr.mxu0 0.0
    %167 = vmatpush1.msra.mxu0 0.0
    %168 = vmatprep.subr.mxu0 0.0
    %169 = vmatpush1.msra.mxu0 0.0
    %170 = vmatprep.subr.mxu0 0.0
    %171 = vmatpush1.msra.mxu0 0.0
    %172 = vmatprep.subr.mxu0 0.0
    %173 = vmatpush1.msra.mxu0 %v140
    %174 = vmatprep.subr.mxu0 0.0
    %175 = vmatpush2.msra.mxu0 0.0
    %176 = vmatprep.subr.mxu0 0.0
    %177 = vmatpush2.msra.mxu0 0.0
    %178 = vmatprep.subr.mxu0 0.0
    %179 = vmatpush2.msra.mxu0 0.0
    %180 = vmatprep.subr.mxu0 0.0
    %181 = vmatpush2.msra.mxu0 0.0
    %182 = vmatprep.subr.mxu0 0.0
    %183 = vmatpush2.msra.mxu0 0.0
    %184 = vmatprep.subr.mxu0 0.0
    %185 = vmatpush2.msra.mxu0 0.0
    %186 = vmatprep.subr.mxu0 0.0
    %187 = vmatpush2.msra.mxu0 0.0
    %188 = vmatprep.subr.mxu0 0.0
    %189 = vmatpush2.msra.mxu0 0.0
    %190 = vmatprep.subr.mxu0 0.0
    %191 = vmatpush2.msra.mxu0 0.0
    %192 = vmatprep.subr.mxu0 0.0
    %193 = vmatpush2.msra.mxu0 0.0
    %194 = vmatprep.subr.mxu0 0.0
    %195 = vmatpush2.msra.mxu0 0.0
    %196 = vmatprep.subr.mxu0 0.0
    %197 = vmatpush2.msra.mxu0 0.0
    %198 = vmatprep.subr.mxu0 0.0
    %199 = vmatpush2.msra.mxu0 0.0
    %200 = vmatprep.subr.mxu0 0.0
    %201 = vmatpush2.msra.mxu0 0.0
    %202 = vmatprep.subr.mxu0 0.0
    %203 = vmatpush2.msra.mxu0 0.0
    %204 = vmatprep.subr.mxu0 0.0
    %205 = vmatpush2.msra.mxu0 0.0
    %206 = vmatprep.mubr.f32.mxu0 0.0
    %207 = vmatmul.mubr.f32.gmra.mxu0 %v133
    %v208 = vpop.f32.mrf.mxu0
    %v209 = vadd.f32 %v129, %v208
    %v210 = vpop.f32.mrf.mxu0
    %211 = vmatprep.mubr.f32.mxu0 0.0
    %212 = vmatmul.mubr.f32.gmra.mxu0 %v136
    %v213 = vpop.f32.mrf.mxu0
    %v214 = vadd.f32 %v130, %v213
    %v215 = vpop.f32.mrf.mxu0
    %216 = vdwg.mxu0
    %v217 = vld [vmem:[#allocation8] sm:$0x1]
    %v218 = vlaneseq
    %v219 = vshrl.u32 %v218, 7
    %v220 = vsub.s32 0, %v219
    %v221 = vrot.slane %v217, %v220
    %v222 = vadd.f32 %v209, %v221
    %v223 = vadd.f32 %v214, %v221
    %v224 = vmax.f32 %v222, 0.0
    %v225 = vmax.f32 %v223, 0.0
    %v226 = vld [vmem:[%s4] sm:$0xff]
    %v227 = vld [vmem:[%s4 + $0x8] sm:$0xff]
    %v228 = vld [vmem:[%s4 + $0x10] sm:$0xff]
    %v229 = vld [vmem:[%s4 + $0x18] sm:$0xff]
    %v230 = vld [vmem:[#allocation8 + $0x1] sm:$0x1]
    %v231 = vlaneseq
    %v232 = vshrl.u32 %v231, 7
    %v233 = vsub.s32 0, %v232
    %v234 = vrot.slane %v230, %v233
    %vm235 = vcmask 261120
    %v237 = vsel %vm235, %v224, 0
    %v240 = vsel %vm235, %v225, 0
    %242 = vmatprep.subr.mxu0 0.0
    %243 = vmatpush1.msra.mxu0 0.0
    %244 = vmatprep.subr.mxu0 0.0
    %245 = vmatpush1.msra.mxu0 0.0
    %246 = vmatprep.subr.mxu0 0.0
    %247 = vmatpush1.msra.mxu0 0.0
    %248 = vmatprep.subr.mxu0 0.0
    %249 = vmatpush1.msra.mxu0 0.0
    %250 = vmatprep.subr.mxu0 0.0
    %251 = vmatpush1.msra.mxu0 0.0
    %252 = vmatprep.subr.mxu0 0.0
    %253 = vmatpush1.msra.mxu0 0.0
    %254 = vmatprep.subr.mxu0 0.0
    %255 = vmatpush1.msra.mxu0 0.0
    %256 = vmatprep.subr.mxu0 0.0
    %257 = vmatpush1.msra.mxu0 0.0
    %258 = vmatprep.subr.mxu0 0.0
    %259 = vmatpush1.msra.mxu0 0.0
    %260 = vmatprep.subr.mxu0 0.0
    %261 = vmatpush1.msra.mxu0 0.0
    %262 = vmatprep.subr.mxu0 0.0
    %263 = vmatpush1.msra.mxu0 0.0
    %264 = vmatprep.subr.mxu0 0.0
    %265 = vmatpush1.msra.mxu0 0.0
    %266 = vmatprep.subr.mxu0 0.0
    %267 = vmatpush1.msra.mxu0 %v229
    %268 = vmatprep.subr.mxu0 0.0
    %269 = vmatpush1.msra.mxu0 %v228
    %270 = vmatprep.subr.mxu0 0.0
    %271 = vmatpush1.msra.mxu0 %v227
    %272 = vmatprep.subr.mxu0 0.0
    %273 = vmatpush1.msra.mxu0 %v226
    %274 = vmatprep.subr.mxu0 0.0
    %275 = vmatpush2.msra.mxu0 0.0
    %276 = vmatprep.subr.mxu0 0.0
    %277 = vmatpush2.msra.mxu0 0.0
    %278 = vmatprep.subr.mxu0 0.0
    %279 = vmatpush2.msra.mxu0 0.0
    %280 = vmatprep.subr.mxu0 0.0
    %281 = vmatpush2.msra.mxu0 0.0
    %282 = vmatprep.subr.mxu0 0.0
    %283 = vmatpush2.msra.mxu0 0.0
    %284 = vmatprep.subr.mxu0 0.0
    %285 = vmatpush2.msra.mxu0 0.0
    %286 = vmatprep.subr.mxu0 0.0
    %287 = vmatpush2.msra.mxu0 0.0
    %288 = vmatprep.subr.mxu0 0.0
    %289 = vmatpush2.msra.mxu0 0.0
    %290 = vmatprep.subr.mxu0 0.0
    %291 = vmatpush2.msra.mxu0 0.0
    %292 = vmatprep.subr.mxu0 0.0
    %293 = vmatpush2.msra.mxu0 0.0
    %294 = vmatprep.subr.mxu0 0.0
    %295 = vmatpush2.msra.mxu0 0.0
    %296 = vmatprep.subr.mxu0 0.0
    %297 = vmatpush2.msra.mxu0 0.0
    %298 = vmatprep.subr.mxu0 0.0
    %299 = vmatpush2.msra.mxu0 0.0
    %300 = vmatprep.subr.mxu0 0.0
    %301 = vmatpush2.msra.mxu0 0.0
    %302 = vmatprep.subr.mxu0 0.0
    %303 = vmatpush2.msra.mxu0 0.0
    %304 = vmatprep.subr.mxu0 0.0
    %305 = vmatpush2.msra.mxu0 0.0
    %306 = vmatprep.mubr.f32.mxu0 0.0
    %307 = vmatmul.mubr.f32.gmra.mxu0 %v237
    %v308 = vpop.f32.mrf.mxu0
    %v309 = vadd.f32 %v234, %v308
    %v310 = vpop.f32.mrf.mxu0
    %311 = vmatprep.mubr.f32.mxu0 0.0
    %312 = vmatmul.mubr.f32.gmra.mxu0 %v240
    %v313 = vpop.f32.mrf.mxu0
    %v314 = vadd.f32 %v234, %v313
    %v315 = vpop.f32.mrf.mxu0
    %316 = vdwg.mxu0
    %v317 = vld [vmem:[#allocation2] sm:$0xff]
    %v318 = vld [vmem:[#allocation2 + $0x8] sm:$0xff]
    %v319 = vld [vmem:[#allocation2 + $0x10] sm:$0xff]
    %v320 = vld [vmem:[#allocation2 + $0x18] sm:$0xff]
    %v321 = vld [vmem:[#allocation8 + $0x2] sm:$0x1]
    %v322 = vlaneseq
    %v323 = vshrl.u32 %v322, 7
    %v324 = vsub.s32 0, %v323
    %v325 = vrot.slane %v321, %v324
    %326 = vmatprep.subr.mxu0 0.0
    %327 = vmatpush1.msra.mxu0 0.0
    %328 = vmatprep.subr.mxu0 0.0
    %329 = vmatpush1.msra.mxu0 0.0
    %330 = vmatprep.subr.mxu0 0.0
    %331 = vmatpush1.msra.mxu0 0.0
    %332 = vmatprep.subr.mxu0 0.0
    %333 = vmatpush1.msra.mxu0 0.0
    %334 = vmatprep.subr.mxu0 0.0
    %335 = vmatpush1.msra.mxu0 0.0
    %336 = vmatprep.subr.mxu0 0.0
    %337 = vmatpush1.msra.mxu0 0.0
    %338 = vmatprep.subr.mxu0 0.0
    %339 = vmatpush1.msra.mxu0 0.0
    %340 = vmatprep.subr.mxu0 0.0
    %341 = vmatpush1.msra.mxu0 0.0
    %342 = vmatprep.subr.mxu0 0.0
    %343 = vmatpush1.msra.mxu0 0.0
    %344 = vmatprep.subr.mxu0 0.0
    %345 = vmatpush1.msra.mxu0 0.0
    %346 = vmatprep.subr.mxu0 0.0
    %347 = vmatpush1.msra.mxu0 0.0
    %348 = vmatprep.subr.mxu0 0.0
    %349 = vmatpush1.msra.mxu0 0.0
    %350 = vmatprep.subr.mxu0 0.0
    %351 = vmatpush1.msra.mxu0 %v320
    %352 = vmatprep.subr.mxu0 0.0
    %353 = vmatpush1.msra.mxu0 %v319
    %354 = vmatprep.subr.mxu0 0.0
    %355 = vmatpush1.msra.mxu0 %v318
    %356 = vmatprep.subr.mxu0 0.0
    %357 = vmatpush1.msra.mxu0 %v317
    %358 = vmatprep.subr.mxu0 0.0
    %359 = vmatpush2.msra.mxu0 0.0
    %360 = vmatprep.subr.mxu0 0.0
    %361 = vmatpush2.msra.mxu0 0.0
    %362 = vmatprep.subr.mxu0 0.0
    %363 = vmatpush2.msra.mxu0 0.0
    %364 = vmatprep.subr.mxu0 0.0
    %365 = vmatpush2.msra.mxu0 0.0
    %366 = vmatprep.subr.mxu0 0.0
    %367 = vmatpush2.msra.mxu0 0.0
    %368 = vmatprep.subr.mxu0 0.0
    %369 = vmatpush2.msra.mxu0 0.0
    %370 = vmatprep.subr.mxu0 0.0
    %371 = vmatpush2.msra.mxu0 0.0
    %372 = vmatprep.subr.mxu0 0.0
    %373 = vmatpush2.msra.mxu0 0.0
    %374 = vmatprep.subr.mxu0 0.0
    %375 = vmatpush2.msra.mxu0 0.0
    %376 = vmatprep.subr.mxu0 0.0
    %377 = vmatpush2.msra.mxu0 0.0
    %378 = vmatprep.subr.mxu0 0.0
    %379 = vmatpush2.msra.mxu0 0.0
    %380 = vmatprep.subr.mxu0 0.0
    %381 = vmatpush2.msra.mxu0 0.0
    %382 = vmatprep.subr.mxu0 0.0
    %383 = vmatpush2.msra.mxu0 0.0
    %384 = vmatprep.subr.mxu0 0.0
    %385 = vmatpush2.msra.mxu0 0.0
    %386 = vmatprep.subr.mxu0 0.0
    %387 = vmatpush2.msra.mxu0 0.0
    %388 = vmatprep.subr.mxu0 0.0
    %389 = vmatpush2.msra.mxu0 0.0
    %390 = vmatprep.mubr.f32.mxu0 0.0
    %391 = vmatmul.mubr.f32.gmra.mxu0 %v237
    %v392 = vpop.f32.mrf.mxu0
    %v393 = vadd.f32 %v325, %v392
    %v394 = vpop.f32.mrf.mxu0
    %395 = vmatprep.mubr.f32.mxu0 0.0
    %396 = vmatmul.mubr.f32.gmra.mxu0 %v240
    %v397 = vpop.f32.mrf.mxu0
    %v398 = vadd.f32 %v325, %v397
    %v399 = vpop.f32.mrf.mxu0
    %400 = vdwg.mxu0
    %v401 = vld [vmem:[%s6] sm:$0xff]
    %v402 = vld [vmem:[%s6 + $0x8] sm:$0xff]
    %v403 = vld [vmem:[%s6 + $0x10] sm:$0xff]
    %v404 = vld [vmem:[%s6 + $0x18] sm:$0xff]
    %v405 = vld [vmem:[#allocation8 + $0x3] sm:$0x1]
    %v406 = vlaneseq
    %v407 = vshrl.u32 %v406, 7
    %v408 = vsub.s32 0, %v407
    %v409 = vrot.slane %v405, %v408
    %410 = vmatprep.subr.mxu0 0.0
    %411 = vmatpush1.msra.mxu0 0.0
    %412 = vmatprep.subr.mxu0 0.0
    %413 = vmatpush1.msra.mxu0 0.0
    %414 = vmatprep.subr.mxu0 0.0
    %415 = vmatpush1.msra.mxu0 0.0
    %416 = vmatprep.subr.mxu0 0.0
    %417 = vmatpush1.msra.mxu0 0.0
    %418 = vmatprep.subr.mxu0 0.0
    %419 = vmatpush1.msra.mxu0 0.0
    %420 = vmatprep.subr.mxu0 0.0
    %421 = vmatpush1.msra.mxu0 0.0
    %422 = vmatprep.subr.mxu0 0.0
    %423 = vmatpush1.msra.mxu0 0.0
    %424 = vmatprep.subr.mxu0 0.0
    %425 = vmatpush1.msra.mxu0 0.0
    %426 = vmatprep.subr.mxu0 0.0
    %427 = vmatpush1.msra.mxu0 0.0
    %428 = vmatprep.subr.mxu0 0.0
    %429 = vmatpush1.msra.mxu0 0.0
    %430 = vmatprep.subr.mxu0 0.0
    %431 = vmatpush1.msra.mxu0 0.0
    %432 = vmatprep.subr.mxu0 0.0
    %433 = vmatpush1.msra.mxu0 0.0
    %434 = vmatprep.subr.mxu0 0.0
    %435 = vmatpush1.msra.mxu0 %v404
    %436 = vmatprep.subr.mxu0 0.0
    %437 = vmatpush1.msra.mxu0 %v403
    %438 = vmatprep.subr.mxu0 0.0
    %439 = vmatpush1.msra.mxu0 %v402
    %440 = vmatprep.subr.mxu0 0.0
    %441 = vmatpush1.msra.mxu0 %v401
    %442 = vmatprep.subr.mxu0 0.0
    %443 = vmatpush2.msra.mxu0 0.0
    %444 = vmatprep.subr.mxu0 0.0
    %445 = vmatpush2.msra.mxu0 0.0
    %446 = vmatprep.subr.mxu0 0.0
    %447 = vmatpush2.msra.mxu0 0.0
    %448 = vmatprep.subr.mxu0 0.0
    %449 = vmatpush2.msra.mxu0 0.0
    %450 = vmatprep.subr.mxu0 0.0
    %451 = vmatpush2.msra.mxu0 0.0
    %452 = vmatprep.subr.mxu0 0.0
    %453 = vmatpush2.msra.mxu0 0.0
    %454 = vmatprep.subr.mxu0 0.0
    %455 = vmatpush2.msra.mxu0 0.0
    %456 = vmatprep.subr.mxu0 0.0
    %457 = vmatpush2.msra.mxu0 0.0
    %458 = vmatprep.subr.mxu0 0.0
    %459 = vmatpush2.msra.mxu0 0.0
    %460 = vmatprep.subr.mxu0 0.0
    %461 = vmatpush2.msra.mxu0 0.0
    %462 = vmatprep.subr.mxu0 0.0
    %463 = vmatpush2.msra.mxu0 0.0
    %464 = vmatprep.subr.mxu0 0.0
    %465 = vmatpush2.msra.mxu0 0.0
    %466 = vmatprep.subr.mxu0 0.0
    %467 = vmatpush2.msra.mxu0 0.0
    %468 = vmatprep.subr.mxu0 0.0
    %469 = vmatpush2.msra.mxu0 0.0
    %470 = vmatprep.subr.mxu0 0.0
    %471 = vmatpush2.msra.mxu0 0.0
    %472 = vmatprep.subr.mxu0 0.0
    %473 = vmatpush2.msra.mxu0 0.0
    %474 = vmatprep.mubr.f32.mxu0 0.0
    %475 = vmatmul.mubr.f32.gmra.mxu0 %v237
    %v476 = vpop.f32.mrf.mxu0
    %v477 = vadd.f32 %v409, %v476
    %v478 = vpop.f32.mrf.mxu0
    %479 = vmatprep.mubr.f32.mxu0 0.0
    %480 = vmatmul.mubr.f32.gmra.mxu0 %v240
    %v481 = vpop.f32.mrf.mxu0
    %v482 = vadd.f32 %v409, %v481
    %v483 = vpop.f32.mrf.mxu0
    %484 = vdwg.mxu0
    %v486 = vsel %vm235, %v309, 0
    %v489 = vsel %vm235, %v314, 0
    %v492 = vsel %vm235, %v393, 0
    %v495 = vsel %vm235, %v398, 0
    %497 = vmatprep.subr.mxu0 0.0
    %498 = vmatpush1.xpose.msra.mxu0 0.0
    %499 = vmatprep.subr.mxu0 0.0
    %500 = vmatpush1.xpose.msra.mxu0 0.0
    %501 = vmatprep.subr.mxu0 0.0
    %502 = vmatpush1.xpose.msra.mxu0 0.0
    %503 = vmatprep.subr.mxu0 0.0
    %504 = vmatpush1.xpose.msra.mxu0 0.0
    %505 = vmatprep.subr.mxu0 0.0
    %506 = vmatpush1.xpose.msra.mxu0 0.0
    %507 = vmatprep.subr.mxu0 0.0
    %508 = vmatpush1.xpose.msra.mxu0 0.0
    %509 = vmatprep.subr.mxu0 0.0
    %510 = vmatpush1.xpose.msra.mxu0 0.0
    %511 = vmatprep.subr.mxu0 0.0
    %512 = vmatpush1.xpose.msra.mxu0 0.0
    %513 = vmatprep.subr.mxu0 0.0
    %514 = vmatpush1.xpose.msra.mxu0 0.0
    %515 = vmatprep.subr.mxu0 0.0
    %516 = vmatpush1.xpose.msra.mxu0 0.0
    %517 = vmatprep.subr.mxu0 0.0
    %518 = vmatpush1.xpose.msra.mxu0 0.0
    %519 = vmatprep.subr.mxu0 0.0
    %520 = vmatpush1.xpose.msra.mxu0 0.0
    %521 = vmatprep.subr.mxu0 0.0
    %522 = vmatpush1.xpose.msra.mxu0 0.0
    %523 = vmatprep.subr.mxu0 0.0
    %524 = vmatpush1.xpose.msra.mxu0 0.0
    %525 = vmatprep.subr.mxu0 0.0
    %526 = vmatpush1.xpose.msra.mxu0 %v495
    %527 = vmatprep.subr.mxu0 0.0
    %528 = vmatpush1.xpose.msra.mxu0 %v492
    %529 = vmatprep.subr.mxu0 0.0
    %530 = vmatpush2.xpose.msra.mxu0 0.0
    %531 = vmatprep.subr.mxu0 0.0
    %532 = vmatpush2.xpose.msra.mxu0 0.0
    %533 = vmatprep.subr.mxu0 0.0
    %534 = vmatpush2.xpose.msra.mxu0 0.0
    %535 = vmatprep.subr.mxu0 0.0
    %536 = vmatpush2.xpose.msra.mxu0 0.0
    %537 = vmatprep.subr.mxu0 0.0
    %538 = vmatpush2.xpose.msra.mxu0 0.0
    %539 = vmatprep.subr.mxu0 0.0
    %540 = vmatpush2.xpose.msra.mxu0 0.0
    %541 = vmatprep.subr.mxu0 0.0
    %542 = vmatpush2.xpose.msra.mxu0 0.0
    %543 = vmatprep.subr.mxu0 0.0
    %544 = vmatpush2.xpose.msra.mxu0 0.0
    %545 = vmatprep.subr.mxu0 0.0
    %546 = vmatpush2.xpose.msra.mxu0 0.0
    %547 = vmatprep.subr.mxu0 0.0
    %548 = vmatpush2.xpose.msra.mxu0 0.0
    %549 = vmatprep.subr.mxu0 0.0
    %550 = vmatpush2.xpose.msra.mxu0 0.0
    %551 = vmatprep.subr.mxu0 0.0
    %552 = vmatpush2.xpose.msra.mxu0 0.0
    %553 = vmatprep.subr.mxu0 0.0
    %554 = vmatpush2.xpose.msra.mxu0 0.0
    %555 = vmatprep.subr.mxu0 0.0
    %556 = vmatpush2.xpose.msra.mxu0 0.0
    %557 = vmatprep.subr.mxu0 0.0
    %558 = vmatpush2.xpose.msra.mxu0 0.0
    %559 = vmatprep.subr.mxu0 0.0
    %560 = vmatpush2.xpose.msra.mxu0 0.0
    %561 = vmatprep.mubr.f32.mxu0 0.0
    %562 = vmatmul.mubr.f32.gmra.mxu0 %v486
    %v563 = vpop.f32.mrf.mxu0
    %v564 = vadd.f32 0.0, %v563
    %v565 = vpop.f32.mrf.mxu0
    %566 = vmatprep.mubr.f32.mxu0 0.0
    %567 = vmatmul.mubr.f32.gmra.mxu0 %v489
    %v568 = vpop.f32.mrf.mxu0
    %v569 = vadd.f32 0.0, %v568
    %v570 = vpop.f32.mrf.mxu0
    %571 = vdwg.mxu0
    %v572 = vmul.f32 %v564, 0.17677669
    %v573 = vmul.f32 %v569, 0.17677669
    %v574 = vld [vmem:[#allocation10] sm:$0xff]
    %v575 = vld [vmem:[#allocation10 + $0x8] sm:$0xff]
    %v576 = vadd.f32 %v572, %v574
    %v577 = vadd.f32 %v573, %v575
    %vm578 = vcmask 130048
    %v579 = vsel %vm578, %v576, -inf
    %580 = vmax.xlane.f32.xlu0 %v579
    %v581 = vpop.xlane.xlu0 %580
    %v582 = vsel %vm578, %v577, -inf
    %583 = vmax.xlane.f32.xlu0 %v582
    %v584 = vpop.xlane.xlu0 %583
    %v585 = vsub.f32 %v576, %v581
    %v586 = vsub.f32 %v577, %v584
    %v587 = vmul.f32 %v585, 1.442695
    %v588 = vpow.pop %v587
    %v589 = vmul.f32 %v586, 1.442695
    %v590 = vpow.pop %v589
    %v591 = vsel %vm578, %v588, 0.0
    %592 = vadd.xlane.f32.xlu0 %v591
    %v593 = vpop.xlane.xlu0 %592
    %v594 = vsel %vm578, %v590, 0.0
    %595 = vadd.xlane.f32.xlu0 %v594
    %v596 = vpop.xlane.xlu0 %595
    %v597 = vrcp.pop %v593
    %v598 = vmul.f32 %v588, %v597
    %v599 = vrcp.pop %v596
    %v600 = vmul.f32 %v590, %v599
    %v602 = vsel %vm578, %v598, 0
    %v605 = vsel %vm578, %v600, 0
    %607 = vmatprep.subr.mxu0 0.0
    %608 = vmatpush1.msra.mxu0 0.0
    %609 = vmatprep.subr.mxu0 0.0
    %610 = vmatpush1.msra.mxu0 0.0
    %611 = vmatprep.subr.mxu0 0.0
    %612 = vmatpush1.msra.mxu0 0.0
    %613 = vmatprep.subr.mxu0 0.0
    %614 = vmatpush1.msra.mxu0 0.0
    %615 = vmatprep.subr.mxu0 0.0
    %616 = vmatpush1.msra.mxu0 0.0
    %617 = vmatprep.subr.mxu0 0.0
    %618 = vmatpush1.msra.mxu0 0.0
    %619 = vmatprep.subr.mxu0 0.0
    %620 = vmatpush1.msra.mxu0 0.0
    %621 = vmatprep.subr.mxu0 0.0
    %622 = vmatpush1.msra.mxu0 0.0
    %623 = vmatprep.subr.mxu0 0.0
    %624 = vmatpush1.msra.mxu0 0.0
    %625 = vmatprep.subr.mxu0 0.0
    %626 = vmatpush1.msra.mxu0 0.0
    %627 = vmatprep.subr.mxu0 0.0
    %628 = vmatpush1.msra.mxu0 0.0
    %629 = vmatprep.subr.mxu0 0.0
    %630 = vmatpush1.msra.mxu0 0.0
    %631 = vmatprep.subr.mxu0 0.0
    %632 = vmatpush1.msra.mxu0 0.0
    %633 = vmatprep.subr.mxu0 0.0
    %634 = vmatpush1.msra.mxu0 0.0
    %635 = vmatprep.subr.mxu0 0.0
    %636 = vmatpush1.msra.mxu0 %v482
    %637 = vmatprep.subr.mxu0 0.0
    %638 = vmatpush1.msra.mxu0 %v477
    %639 = vmatprep.subr.mxu0 0.0
    %640 = vmatpush2.msra.mxu0 0.0
    %641 = vmatprep.subr.mxu0 0.0
    %642 = vmatpush2.msra.mxu0 0.0
    %643 = vmatprep.subr.mxu0 0.0
    %644 = vmatpush2.msra.mxu0 0.0
    %645 = vmatprep.subr.mxu0 0.0
    %646 = vmatpush2.msra.mxu0 0.0
    %647 = vmatprep.subr.mxu0 0.0
    %648 = vmatpush2.msra.mxu0 0.0
    %649 = vmatprep.subr.mxu0 0.0
    %650 = vmatpush2.msra.mxu0 0.0
    %651 = vmatprep.subr.mxu0 0.0
    %652 = vmatpush2.msra.mxu0 0.0
    %653 = vmatprep.subr.mxu0 0.0
    %654 = vmatpush2.msra.mxu0 0.0
    %655 = vmatprep.subr.mxu0 0.0
    %656 = vmatpush2.msra.mxu0 0.0
    %657 = vmatprep.subr.mxu0 0.0
    %658 = vmatpush2.msra.mxu0 0.0
    %659 = vmatprep.subr.mxu0 0.0
    %660 = vmatpush2.msra.mxu0 0.0
    %661 = vmatprep.subr.mxu0 0.0
    %662 = vmatpush2.msra.mxu0 0.0
    %663 = vmatprep.subr.mxu0 0.0
    %664 = vmatpush2.msra.mxu0 0.0
    %665 = vmatprep.subr.mxu0 0.0
    %666 = vmatpush2.msra.mxu0 0.0
    %667 = vmatprep.subr.mxu0 0.0
    %668 = vmatpush2.msra.mxu0 0.0
    %669 = vmatprep.subr.mxu0 0.0
    %670 = vmatpush2.msra.mxu0 0.0
    %671 = vmatprep.mubr.f32.mxu0 0.0
    %672 = vmatmul.mubr.f32.gmra.mxu0 %v602
    %v673 = vpop.f32.mrf.mxu0
    %v674 = vadd.f32 0.0, %v673
    %v675 = vpop.f32.mrf.mxu0
    %676 = vmatprep.mubr.f32.mxu0 0.0
    %677 = vmatmul.mubr.f32.gmra.mxu0 %v605
    %v678 = vpop.f32.mrf.mxu0
    %v679 = vadd.f32 0.0, %v678
    %v680 = vpop.f32.mrf.mxu0
    %681 = vdwg.mxu0
    %v682 = vld [vmem:[#allocation5] sm:$0xff]
    %v683 = vld [vmem:[#allocation5 + $0x8] sm:$0xff]
    %v684 = vld [vmem:[#allocation5 + $0x10] sm:$0xff]
    %v685 = vld [vmem:[#allocation5 + $0x18] sm:$0xff]
    %v686 = vld [vmem:[#allocation8 + $0x4] sm:$0x1]
    %v687 = vlaneseq
    %v688 = vshrl.u32 %v687, 7
    %v689 = vsub.s32 0, %v688
    %v690 = vrot.slane %v686, %v689
    %v692 = vsel %vm235, %v674, 0
    %v695 = vsel %vm235, %v679, 0
    %697 = vmatprep.subr.mxu0 0.0
    %698 = vmatpush1.msra.mxu0 0.0
    %699 = vmatprep.subr.mxu0 0.0
    %700 = vmatpush1.msra.mxu0 0.0
    %701 = vmatprep.subr.mxu0 0.0
    %702 = vmatpush1.msra.mxu0 0.0
    %703 = vmatprep.subr.mxu0 0.0
    %704 = vmatpush1.msra.mxu0 0.0
    %705 = vmatprep.subr.mxu0 0.0
    %706 = vmatpush1.msra.mxu0 0.0
    %707 = vmatprep.subr.mxu0 0.0
    %708 = vmatpush1.msra.mxu0 0.0
    %709 = vmatprep.subr.mxu0 0.0
    %710 = vmatpush1.msra.mxu0 0.0
    %711 = vmatprep.subr.mxu0 0.0
    %712 = vmatpush1.msra.mxu0 0.0
    %713 = vmatprep.subr.mxu0 0.0
    %714 = vmatpush1.msra.mxu0 0.0
    %715 = vmatprep.subr.mxu0 0.0
    %716 = vmatpush1.msra.mxu0 0.0
    %717 = vmatprep.subr.mxu0 0.0
    %718 = vmatpush1.msra.mxu0 0.0
    %719 = vmatprep.subr.mxu0 0.0
    %720 = vmatpush1.msra.mxu0 0.0
    %721 = vmatprep.subr.mxu0 0.0
    %722 = vmatpush1.msra.mxu0 %v685
    %723 = vmatprep.subr.mxu0 0.0
    %724 = vmatpush1.msra.mxu0 %v684
    %725 = vmatprep.subr.mxu0 0.0
    %726 = vmatpush1.msra.mxu0 %v683
    %727 = vmatprep.subr.mxu0 0.0
    %728 = vmatpush1.msra.mxu0 %v682
    %729 = vmatprep.subr.mxu0 0.0
    %730 = vmatpush2.msra.mxu0 0.0
    %731 = vmatprep.subr.mxu0 0.0
    %732 = vmatpush2.msra.mxu0 0.0
    %733 = vmatprep.subr.mxu0 0.0
    %734 = vmatpush2.msra.mxu0 0.0
    %735 = vmatprep.subr.mxu0 0.0
    %736 = vmatpush2.msra.mxu0 0.0
    %737 = vmatprep.subr.mxu0 0.0
    %738 = vmatpush2.msra.mxu0 0.0
    %739 = vmatprep.subr.mxu0 0.0
    %740 = vmatpush2.msra.mxu0 0.0
    %741 = vmatprep.subr.mxu0 0.0
    %742 = vmatpush2.msra.mxu0 0.0
    %743 = vmatprep.subr.mxu0 0.0
    %744 = vmatpush2.msra.mxu0 0.0
    %745 = vmatprep.subr.mxu0 0.0
    %746 = vmatpush2.msra.mxu0 0.0
    %747 = vmatprep.subr.mxu0 0.0
    %748 = vmatpush2.msra.mxu0 0.0
    %749 = vmatprep.subr.mxu0 0.0
    %750 = vmatpush2.msra.mxu0 0.0
    %751 = vmatprep.subr.mxu0 0.0
    %752 = vmatpush2.msra.mxu0 0.0
    %753 = vmatprep.subr.mxu0 0.0
    %754 = vmatpush2.msra.mxu0 0.0
    %755 = vmatprep.subr.mxu0 0.0
    %756 = vmatpush2.msra.mxu0 0.0
    %757 = vmatprep.subr.mxu0 0.0
    %758 = vmatpush2.msra.mxu0 0.0
    %759 = vmatprep.subr.mxu0 0.0
    %760 = vmatpush2.msra.mxu0 0.0
    %761 = vmatprep.mubr.f32.mxu0 0.0
    %762 = vmatmul.mubr.f32.gmra.mxu0 %v692
    %v763 = vpop.f32.mrf.mxu0
    %v764 = vadd.f32 %v690, %v763
    %v765 = vpop.f32.mrf.mxu0
    %766 = vmatprep.mubr.f32.mxu0 0.0
    %767 = vmatmul.mubr.f32.gmra.mxu0 %v695
    %v768 = vpop.f32.mrf.mxu0
    %v769 = vadd.f32 %v690, %v768
    %v770 = vpop.f32.mrf.mxu0
    %771 = vdwg.mxu0
    %v772 = vadd.f32 %v224, %v764
    %v773 = vadd.f32 %v225, %v769
    %v774 = vsel %vm235, %v772, 0.0
    %775 = vadd.xlane.f32.xlu0 %v774
    %v776 = vpop.xlane.xlu0 %775
    %v777 = vsel %vm235, %v773, 0.0
    %778 = vadd.xlane.f32.xlu0 %v777
    %v779 = vpop.xlane.xlu0 %778
    %v780 = vrcp.pop 32.0
    %v781 = vmul.f32 %v776, %v780
    %v782 = vmul.f32 %v779, %v780
    %v783 = vsub.f32 %v772, %v781
    %v784 = vsub.f32 %v773, %v782
    %v785 = vmul.f32 %v783, %v783
    %v786 = vmul.f32 %v784, %v784
    %v787 = vsel %vm235, %v785, 0.0
    %788 = vadd.xlane.f32.xlu0 %v787
    %v789 = vpop.xlane.xlu0 %788
    %v790 = vsel %vm235, %v786, 0.0
    %791 = vadd.xlane.f32.xlu0 %v790
    %v792 = vpop.xlane.xlu0 %791
    %v793 = vmul.f32 %v789, %v780
    %v794 = vmul.f32 %v792, %v780
    %v795 = vadd.f32 %v793, 1e-05
    %v796 = vadd.f32 %v794, 1e-05
    %v797 = vrsqrt.pop %v795
    %v798 = vrsqrt.pop %v796
    %v799 = vmul.f32 %v783, %v797
    %v800 = vmul.f32 %v784, %v798
    %v801 = vld [vmem:[#allocation8 + $0x5] sm:$0x1]
    %v802 = vlaneseq
    %v803 = vshrl.u32 %v802, 7
    %v804 = vsub.s32 0, %v803
    %v805 = vrot.slane %v801, %v804
    %v806 = vmul.f32 %v799, %v805
    %v807 = vmul.f32 %v800, %v805
    %v808 = vld [vmem:[#allocation8 + $0x6] sm:$0x1]
    %v809 = vlaneseq
    %v810 = vshrl.u32 %v809, 7
    %v811 = vsub.s32 0, %v810
    %v812 = vrot.slane %v808, %v811
    %v813 = vadd.f32 %v806, %v812
    %v814 = vadd.f32 %v807, %v812
    %v815 = vld [vmem:[#allocation7] sm:$0xff]
    %v816 = vld [vmem:[#allocation7 + $0x8] sm:$0xff]
    %v817 = vld [vmem:[#allocation7 + $0x10] sm:$0xff]
    %v818 = vld [vmem:[#allocation7 + $0x18] sm:$0xff]
    %v819 = vld [vmem:[#allocation8 + $0x7] sm:$0x1]
    %v820 = vlaneseq
    %v821 = vshrl.u32 %v820, 7
    %v822 = vsub.s32 0, %v821
    %v823 = vrot.slane %v819, %v822
    %v825 = vsel %vm235, %v813, 0
    %v828 = vsel %vm235, %v814, 0
    %830 = vmatprep.subr.mxu0 0.0
    %831 = vmatpush1.msra.mxu0 0.0
    %832 = vmatprep.subr.mxu0 0.0
    %833 = vmatpush1.msra.mxu0 0.0
    %834 = vmatprep.subr.mxu0 0.0
    %835 = vmatpush1.msra.mxu0 0.0
    %836 = vmatprep.subr.mxu0 0.0
    %837 = vmatpush1.msra.mxu0 0.0
    %838 = vmatprep.subr.mxu0 0.0
    %839 = vmatpush1.msra.mxu0 0.0
    %840 = vmatprep.subr.mxu0 0.0
    %841 = vmatpush1.msra.mxu0 0.0
    %842 = vmatprep.subr.mxu0 0.0
    %843 = vmatpush1.msra.mxu0 0.0
    %844 = vmatprep.subr.mxu0 0.0
    %845 = vmatpush1.msra.mxu0 0.0
    %846 = vmatprep.subr.mxu0 0.0
    %847 = vmatpush1.msra.mxu0 0.0
    %848 = vmatprep.subr.mxu0 0.0
    %849 = vmatpush1.msra.mxu0 0.0
    %850 = vmatprep.subr.mxu0 0.0
    %851 = vmatpush1.msra.mxu0 0.0
    %852 = vmatprep.subr.mxu0 0.0
    %853 = vmatpush1.msra.mxu0 0.0
    %854 = vmatprep.subr.mxu0 0.0
    %855 = vmatpush1.msra.mxu0 %v818
    %856 = vmatprep.subr.mxu0 0.0
    %857 = vmatpush1.msra.mxu0 %v817
    %858 = vmatprep.subr.mxu0 0.0
    %859 = vmatpush1.msra.mxu0 %v816
    %860 = vmatprep.subr.mxu0 0.0
    %861 = vmatpush1.msra.mxu0 %v815
    %862 = vmatprep.subr.mxu0 0.0
    %863 = vmatpush2.msra.mxu0 0.0
    %864 = vmatprep.subr.mxu0 0.0
    %865 = vmatpush2.msra.mxu0 0.0
    %866 = vmatprep.subr.mxu0 0.0
    %867 = vmatpush2.msra.mxu0 0.0
    %868 = vmatprep.subr.mxu0 0.0
    %869 = vmatpush2.msra.mxu0 0.0
    %870 = vmatprep.subr.mxu0 0.0
    %871 = vmatpush2.msra.mxu0 0.0
    %872 = vmatprep.subr.mxu0 0.0
    %873 = vmatpush2.msra.mxu0 0.0
    %874 = vmatprep.subr.mxu0 0.0
    %875 = vmatpush2.msra.mxu0 0.0
    %876 = vmatprep.subr.mxu0 0.0
    %877 = vmatpush2.msra.mxu0 0.0
    %878 = vmatprep.subr.mxu0 0.0
    %879 = vmatpush2.msra.mxu0 0.0
    %880 = vmatprep.subr.mxu0 0.0
    %881 = vmatpush2.msra.mxu0 0.0
    %882 = vmatprep.subr.mxu0 0.0
    %883 = vmatpush2.msra.mxu0 0.0
    %884 = vmatprep.subr.mxu0 0.0
    %885 = vmatpush2.msra.mxu0 0.0
    %886 = vmatprep.subr.mxu0 0.0
    %887 = vmatpush2.msra.mxu0 0.0
    %888 = vmatprep.subr.mxu0 0.0
    %889 = vmatpush2.msra.mxu0 0.0
    %890 = vmatprep.subr.mxu0 0.0
    %891 = vmatpush2.msra.mxu0 0.0
    %892 = vmatprep.subr.mxu0 0.0
    %893 = vmatpush2.msra.mxu0 0.0
    %894 = vmatprep.mubr.f32.mxu0 0.0
    %895 = vmatmul.mubr.f32.gmra.mxu0 %v825
    %v896 = vpop.f32.mrf.mxu0
    %v897 = vadd.f32 %v823, %v896
    %v898 = vpop.f32.mrf.mxu0
    %899 = vmatprep.mubr.f32.mxu0 0.0
    %900 = vmatmul.mubr.f32.gmra.mxu0 %v828
    %v901 = vpop.f32.mrf.mxu0
    %v902 = vadd.f32 %v823, %v901
    %v903 = vpop.f32.mrf.mxu0
    %904 = vdwg.mxu0
    %v905 = vmax.f32 %v897, 0.0
    %v906 = vmax.f32 %v902, 0.0
    %v907 = vsel %vm235, %v905, 0.0
    %908 = vadd.xlane.f32.xlu0 %v907
    %v909 = vpop.xlane.xlu0 %908
    %v910 = vsel %vm235, %v906, 0.0
    %911 = vadd.xlane.f32.xlu0 %v910
    %v912 = vpop.xlane.xlu0 %911
    %v913 = vmul.f32 %v909, %v780
    %v914 = vmul.f32 %v912, %v780
    %v915 = vsub.f32 %v905, %v913
    %v916 = vsub.f32 %v906, %v914
    %v917 = vmul.f32 %v915, %v915
    %v918 = vmul.f32 %v916, %v916
    %v919 = vsel %vm235, %v917, 0.0
    %920 = vadd.xlane.f32.xlu0 %v919
    %v921 = vpop.xlane.xlu0 %920
    %v922 = vsel %vm235, %v918, 0.0
    %923 = vadd.xlane.f32.xlu0 %v922
    %v924 = vpop.xlane.xlu0 %923
    %v925 = vmul.f32 %v921, %v780
    %v926 = vmul.f32 %v924, %v780
    %v927 = vadd.f32 %v925, 1e-05
    %v928 = vadd.f32 %v926, 1e-05
    %v929 = vrsqrt.pop %v927
    %v930 = vrsqrt.pop %v928
    %v931 = vmul.f32 %v915, %v929
    %v932 = vmul.f32 %v916, %v930
    %v933 = vld [vmem:[#allocation8 + $0x8] sm:$0x1]
    %v934 = vlaneseq
    %v935 = vshrl.u32 %v934, 7
    %v936 = vsub.s32 0, %v935
    %v937 = vrot.slane %v933, %v936
    %v938 = vmul.f32 %v931, %v937
    %v939 = vmul.f32 %v932, %v937
    %v940 = vld [vmem:[#allocation8 + $0x9] sm:$0x1]
    %v941 = vlaneseq
    %v942 = vshrl.u32 %v941, 7
    %v943 = vsub.s32 0, %v942
    %v944 = vrot.slane %v940, %v943
    %v945 = vadd.f32 %v938, %v944
    %v946 = vadd.f32 %v939, %v944
    %947 = vst.msk [vmem:[#allocation11] sm:$0xff] %vm235, %v945
    %948 = vst.msk [vmem:[#allocation11 + $0x8] sm:$0xff] %vm235, %v946
    // Predicated region
    $region66: #{attention_maf_forward.1} parent=1 // pred_check
      _
    $region67: #{attention_maf_forward.1} parent=1 // pred_check_branch
      %950 = sbr.rel (0) target = $region69
    $region68: #{attention_maf_forward.1} parent=1 // pred_region
      %s952 = ssub.s32 256, 256
      %953 = vsyncadd [#allocation4], %s952
      %s954 = sshll.u32 [#allocation11], 4
      %s955 = int_to_ptr.vmem [resolvable:$true] %s954
      %960 = dma.vmem_to_hbm [thread:$0]  %s955, 256, %s11, [#allocation4], 128, 128, 8
    $region69: #{attention_maf_forward.1} parent=1 // pred_fallthru
      _
    // Predicated region
    $region70: #{attention_maf_forward.1} parent=1 // pred_check
      _
    $region71: #{attention_maf_forward.1} parent=1 // pred_check_branch
      %962 = sbr.rel (0) target = $region73
    $region72: #{attention_maf_forward.1} parent=1 // pred_region
      %963 = dma.done [#allocation4], 256
    $region73: #{attention_maf_forward.1} parent=1 // pred_fallthru
      _
    %964 = vsyncpa [#allocation3], 1
    %965 = vsyncpa [#allocation6], 1
    %966 = vsyncpa [#allocation9], 1
    %967 = vsyncpa [#allocation4], 1

</llo_original>
